<compile_context>
chip_gen: v5e
topology: v5e:2x2
jax: 0.10.0
libtpu: 0.0.40
codegen_flags: <defaults>
</compile_context>

<pallas_src>
import jax
import jax.numpy as jnp
from jax.experimental import pallas as pl
from jax.experimental.pallas import tpu as pltpu

_LANE = 128      # lane width (pad the *hidden* dim of the resident weights)
_SUBLANE = 8     # sublane granularity for the batch tile


def _round_up(n, m):
    return ((n + m - 1) // m) * m


def dqn_kernel(x_ref, w1_ref, b1_ref, w2_ref, b2_ref, o_ref):
    # fc1: [tb, inp] @ [inp, hid_p] (f32 accumulate) + f32 bias
    h = jnp.dot(x_ref[...], w1_ref[...],
                preferred_element_type=jnp.float32) + b1_ref[...]
    # relu1(0.01) -> relu2(0.01) -> relu3(0.1) compose into a single LeakyReLU
    # with slope 1e-5. NOTE: only correct because all slopes are > 0 (negatives
    # stay negative through each stage); revisit if any slope changes sign.
    h = jnp.where(h >= 0, h, 1e-5 * h)
    # fc2: [tb, hid_p] @ [hid_p, ncls] (f32 accumulate) + f32 bias.
    # The cast is a no-op on the f32 path; on the bf16 path only the MXU
    # operands are rounded, the epilogue stays f32.
    o_ref[...] = jnp.dot(h.astype(w2_ref.dtype), w2_ref[...],
                         preferred_element_type=jnp.float32) + b2_ref[...]


def dqn_forward(x, w1, b1, w2, b2, *, block_b=1024, mxu_dtype=jnp.float32):
    """Forward pass of DQN.

    PyTorch-convention params: w1 [hid, inp], b1 [hid], w2 [ncls, hid],
    b2 [ncls]. x is [B, inp] (any dtype; cast to f32 like
    `x.type(torch.FloatTensor)`). Returns [B, ncls] float32.

    mxu_dtype: dtype of the MXU operands (x / W1 / W2). jnp.bfloat16 is
    recommended on v6e/v7x; accumulation and the bias+LeakyReLU epilogue are
    always f32.
    """
    B, inp = x.shape
    hid, ncls = w1.shape[0], w2.shape[0]
    hid_p = _round_up(hid, _LANE)          # only the hidden dim is lane-padded

    # ---- batch tile selection -------------------------------------------
    tb = min(block_b, _round_up(B, _SUBLANE))
    tb = max(_SUBLANE, (tb // _SUBLANE) * _SUBLANE)
    # Shrink the tile while batch padding would waste more than ~12.5% of B.
    while tb > _SUBLANE and (_round_up(B, tb) - B) * 8 > B:
        tb = max(_SUBLANE, ((tb // 2) // _SUBLANE) * _SUBLANE)
    b_p = _round_up(B, tb)
    # Keep >=2 grid steps for non-trivial batches so v7x's second TensorCore
    # gets work (no-op on v5e/v6e), but only if the extra padding stays small.
    if b_p // tb < 2 and B >= 2 * _SUBLANE:
        tb2 = max(_SUBLANE, ((b_p // 2) // _SUBLANE) * _SUBLANE)
        if _round_up(B, tb2) - B <= max(B // 8, _SUBLANE):
            tb = tb2
            b_p = _round_up(B, tb)
    grid = (b_p // tb,)

    # ---- host-side prep (cheap: only batch padding + tiny weight padding) --
    x_f = x.astype(jnp.float32).astype(mxu_dtype)       # f32 cast done once
    x_p = x_f if b_p == B else jnp.pad(x_f, ((0, b_p - B), (0, 0)))
    # Pre-transposed weights; pad only the hidden dim (zeros -> padded lanes of
    # the fc1 output are exactly zero and contribute nothing to fc2).
    w1_p = jnp.pad(jnp.transpose(w1).astype(mxu_dtype), ((0, 0), (0, hid_p - hid)))
    w2_p = jnp.pad(jnp.transpose(w2).astype(mxu_dtype), ((0, hid_p - hid), (0, 0)))
    b1_p = jnp.pad(b1.astype(jnp.float32).reshape(1, -1), ((0, 0), (0, hid_p - hid)))
    b2_p = b2.astype(jnp.float32).reshape(1, -1)

    itemsize = jnp.dtype(mxu_dtype).itemsize

    # Actual HBM traffic: streamed x + out, weights/biases read once (resident).
    cost = pl.CostEstimate(
        flops=2 * B * (inp * hid + hid * ncls),
        transcendentals=0,
        bytes_accessed=b_p * inp * itemsize
        + b_p * ncls * 4
        + (inp * hid_p + hid_p * ncls) * itemsize
        + (hid_p + ncls) * 4,
    )

    # VMEM budget: lane-rounded footprints (VMEM tiles are (8,128) even when
    # the HBM block is narrower), x/out double-buffered, weights counted twice
    # as a worst case, plus the fc1 intermediate. Generous 2x margin; clamp to
    # [32 MiB, 64 MiB] (<= v7x physical, > v5e's 16 MiB scoped default).
    inp_v = _round_up(inp, _LANE)
    ncls_v = _round_up(ncls, _LANE)
    vmem_need = (
        2 * tb * inp_v * itemsize
        + 2 * tb * ncls_v * 4
        + 2 * (inp_v * hid_p + hid_p * ncls_v) * itemsize
        + 2 * 8 * (hid_p + ncls_v) * 4
        + 2 * tb * hid_p * 4
    )
    vmem_limit = int(min(64 * 2**20, max(32 * 2**20, 2 * vmem_need)))

    def _run(resident_mode):
        def rspec(shape):
            # Grid-resident blocks (constant index_map): single-buffer if the
            # jax version supports it, else default double-buffering.
            if resident_mode is None:
                return pl.BlockSpec(shape, lambda i: (0, 0))
            return pl.BlockSpec(shape, lambda i: (0, 0),
                                pipeline_mode=resident_mode)

        fn = pl.pallas_call(
            dqn_kernel,
            out_shape=jax.ShapeDtypeStruct((b_p, ncls), jnp.float32),
            grid=grid,
            in_specs=[
                pl.BlockSpec((tb, inp), lambda i: (i, 0)),   # x: streamed, unpadded lanes
                rspec((inp, hid_p)),                         # W1 (resident)
                rspec((1, hid_p)),                           # b1 (resident)
                rspec((hid_p, ncls)),                        # W2 (resident)
                rspec((1, ncls)),                            # b2 (resident)
            ],
            out_specs=pl.BlockSpec((tb, ncls), lambda i: (i, 0)),  # unpadded lanes
            compiler_params=pltpu.CompilerParams(
                dimension_semantics=("parallel",),           # batch axis -> 2 TCs on v7x
                vmem_limit_bytes=vmem_limit),
            cost_estimate=cost,
        )
        return fn(x_p, w1_p, b1_p, w2_p, b2_p)

    try:
        out_p = _run(pl.Buffered(1))
    except Exception:
        # Fallback for jax versions that reject single-buffered resident blocks.
        out_p = _run(None)

    # Padded batch rows (zeros -> b1 -> garbage through fc2) are sliced away.
    return out_p if b_p == B else out_p[:B]


def init_params(key, inp_size, hid_size, num_class):
    """Deterministic PyTorch-style nn.Linear init: U(-1/sqrt(fan_in), ...)."""
    k1, k2, k3, k4 = jax.random.split(key, 4)
    bound1 = 1.0 / (inp_size ** 0.5)
    bound2 = 1.0 / (hid_size ** 0.5)
    w1 = jax.random.uniform(k1, (hid_size, inp_size), jnp.float32, -bound1, bound1)
    b1 = jax.random.uniform(k2, (hid_size,), jnp.float32, -bound1, bound1)
    w2 = jax.random.uniform(k3, (num_class, hid_size), jnp.float32, -bound2, bound2)
    b2 = jax.random.uniform(k4, (num_class,), jnp.float32, -bound2, bound2)
    return w1, b1, w2, b2


if __name__ == "__main__":
    key = jax.random.PRNGKey(0)
    kx, kp = jax.random.split(key)

    B, INP, HID, NCLS = 8, 16, 32, 4
    x = jax.random.normal(kx, (B, INP), dtype=jnp.float32)
    w1, b1, w2, b2 = init_params(kp, INP, HID, NCLS)

    # Pure-JAX reference (same math as the PyTorch forward).
    def leaky(v, s):
        return jnp.where(v >= 0, v, s * v)

    def torch_ref(xv):
        return leaky(leaky(leaky(xv @ w1.T + b1, 0.01), 0.01), 0.1) @ w2.T + b2

    # 1) Small batch, exact f32 path (matches x.type(torch.FloatTensor)).
    out = dqn_forward(x, w1, b1, w2, b2)
    jax.block_until_ready(out)
    assert out.shape == (B, NCLS)
    assert jnp.allclose(out, torch_ref(x), atol=1e-5, rtol=1e-5), "f32 mismatch"

    # 2) Batch that exercises the multi-step, batch-padded grid path.
    B2 = 50
    x2 = jax.random.normal(jax.random.PRNGKey(1), (B2, INP), dtype=jnp.float32)
    out2 = dqn_forward(x2, w1, b1, w2, b2, block_b=16)
    jax.block_until_ready(out2)
    assert out2.shape == (B2, NCLS)
    assert jnp.allclose(out2, torch_ref(x2), atol=1e-5, rtol=1e-5), "grid mismatch"

    # 3) bf16 MXU operands (recommended on v6e/v7x); epilogue stays f32, only
    #    operand rounding differs, so a loose tolerance suffices.
    out3 = dqn_forward(x, w1, b1, w2, b2, mxu_dtype=jnp.bfloat16)
    jax.block_until_ready(out3)
    assert out3.shape == (B, NCLS)
    assert jnp.allclose(out3, torch_ref(x), atol=5e-2, rtol=5e-2), "bf16 mismatch"

    print("KERNEL_OK")
</pallas_src>

<mosaic_0001>
module attributes {stable_mosaic.version = 11 : i64} {
  func.func @dqn_kernel(%arg0: i32, %arg1: memref<8x16xf32, #tpu.memory_space<vmem>>, %arg2: memref<16x128xf32, #tpu.memory_space<vmem>>, %arg3: memref<1x128xf32, #tpu.memory_space<vmem>>, %arg4: memref<128x4xf32, #tpu.memory_space<vmem>>, %arg5: memref<1x4xf32, #tpu.memory_space<vmem>>, %arg6: memref<8x4xf32, #tpu.memory_space<vmem>>) attributes {dimension_semantics = [#tpu.dimension_semantics<parallel>], iteration_bounds = array<i64: 1>, scalar_prefetch = 0 : i64, scratch_operands = 0 : i64, tpu.core_type = #tpu.core_type<tc>, window_params = [{transform_indices = @transform_0, window_bounds = array<i64: 8, 16>}, {pipeline_mode = #tpu.pipeline_mode<synchronous>, transform_indices = @transform_1, window_bounds = array<i64: 16, 128>}, {pipeline_mode = #tpu.pipeline_mode<synchronous>, transform_indices = @transform_2, window_bounds = array<i64: 1, 128>}, {pipeline_mode = #tpu.pipeline_mode<synchronous>, transform_indices = @transform_3, window_bounds = array<i64: 128, 4>}, {pipeline_mode = #tpu.pipeline_mode<synchronous>, transform_indices = @transform_4, window_bounds = array<i64: 1, 4>}, {transform_indices = @transform_5, window_bounds = array<i64: 8, 4>}]} {
    %c0 = arith.constant 0 : index
    %c0_0 = arith.constant 0 : index
    %0 = vector.load %arg1[%c0, %c0_0] : memref<8x16xf32, #tpu.memory_space<vmem>>, vector<8x16xf32>
    %c0_1 = arith.constant 0 : index
    %c0_2 = arith.constant 0 : index
    %1 = vector.load %arg2[%c0_1, %c0_2] : memref<16x128xf32, #tpu.memory_space<vmem>>, vector<16x128xf32>
    %cst = arith.constant dense<0.000000e+00> : vector<8x128xf32>
    %2 = tpu.matmul %0, %1, %cst {dimension_numbers = #tpu.dot_dimension_numbers<[1], [0], [0], [1], [0, 0, 1, 1], [], []>} : vector<8x16xf32>, vector<16x128xf32>, vector<8x128xf32> -> vector<8x128xf32>
    %c0_3 = arith.constant 0 : index
    %c0_4 = arith.constant 0 : index
    %3 = vector.load %arg3[%c0_3, %c0_4] : memref<1x128xf32, #tpu.memory_space<vmem>>, vector<1x128xf32>
    %4 = vector.broadcast %3 : vector<1x128xf32> to vector<8x128xf32>
    %5 = arith.addf %2, %4 : vector<8x128xf32>
    %cst_5 = arith.constant 0.000000e+00 : f32
    %6 = vector.broadcast %cst_5 : f32 to vector<8x128xf32>
    %7 = arith.cmpf oge, %5, %6 : vector<8x128xf32>
    %cst_6 = arith.constant 9.99999974E-6 : f32
    %8 = vector.broadcast %cst_6 : f32 to vector<8x128xf32>
    %9 = arith.mulf %8, %5 : vector<8x128xf32>
    %10 = arith.select %7, %5, %9 : vector<8x128xi1>, vector<8x128xf32>
    %c0_7 = arith.constant 0 : index
    %c0_8 = arith.constant 0 : index
    %11 = vector.load %arg4[%c0_7, %c0_8] : memref<128x4xf32, #tpu.memory_space<vmem>>, vector<128x4xf32>
    %cst_9 = arith.constant dense<0.000000e+00> : vector<8x4xf32>
    %12 = tpu.matmul %10, %11, %cst_9 {dimension_numbers = #tpu.dot_dimension_numbers<[1], [0], [0], [1], [0, 0, 1, 1], [], []>} : vector<8x128xf32>, vector<128x4xf32>, vector<8x4xf32> -> vector<8x4xf32>
    %c0_10 = arith.constant 0 : index
    %c0_11 = arith.constant 0 : index
    %13 = vector.load %arg5[%c0_10, %c0_11] : memref<1x4xf32, #tpu.memory_space<vmem>>, vector<1x4xf32>
    %14 = vector.broadcast %13 : vector<1x4xf32> to vector<8x4xf32>
    %15 = arith.addf %12, %14 : vector<8x4xf32>
    %c0_12 = arith.constant 0 : index
    %c0_13 = arith.constant 0 : index
    %16 = vector.load %arg6[%c0_12, %c0_13] : memref<8x4xf32, #tpu.memory_space<vmem>>, vector<8x4xf32>
    tpu.vector_store %arg6[%c0_12, %c0_13], %15 {strides = array<i32>} : memref<8x4xf32, #tpu.memory_space<vmem>>, vector<8x4xf32>,
    return
  }
  func.func @transform_0(%arg0: i32) -> (i32, i32) {
    %c0_i32 = arith.constant 0 : i32
    %c0_i32_0 = arith.constant 0 : i32
    return %arg0, %c0_i32 : i32, i32
  }
  func.func @transform_1(%arg0: i32) -> (i32, i32) {
    %c0_i32 = arith.constant 0 : i32
    %c0_i32_0 = arith.constant 0 : i32
    %c0_i32_1 = arith.constant 0 : i32
    return %c0_i32, %c0_i32_0 : i32, i32
  }
  func.func @transform_2(%arg0: i32) -> (i32, i32) {
    %c0_i32 = arith.constant 0 : i32
    %c0_i32_0 = arith.constant 0 : i32
    %c0_i32_1 = arith.constant 0 : i32
    return %c0_i32, %c0_i32_0 : i32, i32
  }
  func.func @transform_3(%arg0: i32) -> (i32, i32) {
    %c0_i32 = arith.constant 0 : i32
    %c0_i32_0 = arith.constant 0 : i32
    %c0_i32_1 = arith.constant 0 : i32
    return %c0_i32, %c0_i32_0 : i32, i32
  }
  func.func @transform_4(%arg0: i32) -> (i32, i32) {
    %c0_i32 = arith.constant 0 : i32
    %c0_i32_0 = arith.constant 0 : i32
    %c0_i32_1 = arith.constant 0 : i32
    return %c0_i32, %c0_i32_0 : i32, i32
  }
  func.func @transform_5(%arg0: i32) -> (i32, i32) {
    %c0_i32 = arith.constant 0 : i32
    %c0_i32_0 = arith.constant 0 : i32
    return %arg0, %c0_i32 : i32, i32
  }
}

module attributes {stable_mosaic.version = 11 : i64} {
  func.func @dqn_kernel(%arg0: i32, %arg1: memref<8x16xf32, #tpu.memory_space<vmem>>, %arg2: memref<16x128xf32, #tpu.memory_space<vmem>>, %arg3: memref<1x128xf32, #tpu.memory_space<vmem>>, %arg4: memref<128x4xf32, #tpu.memory_space<vmem>>, %arg5: memref<1x4xf32, #tpu.memory_space<vmem>>, %arg6: memref<8x4xf32, #tpu.memory_space<vmem>>) attributes {dimension_semantics = [#tpu.dimension_semantics<parallel>], iteration_bounds = array<i64: 1>, scalar_prefetch = 0 : i64, scratch_operands = 0 : i64, tpu.core_type = #tpu.core_type<tc>, window_params = [{transform_indices = @transform_0, window_bounds = array<i64: 8, 16>}, {pipeline_mode = #tpu.pipeline_mode<synchronous>, transform_indices = @transform_1, window_bounds = array<i64: 16, 128>}, {pipeline_mode = #tpu.pipeline_mode<synchronous>, transform_indices = @transform_2, window_bounds = array<i64: 1, 128>}, {pipeline_mode = #tpu.pipeline_mode<synchronous>, transform_indices = @transform_3, window_bounds = array<i64: 128, 4>}, {pipeline_mode = #tpu.pipeline_mode<synchronous>, transform_indices = @transform_4, window_bounds = array<i64: 1, 4>}, {transform_indices = @transform_5, window_bounds = array<i64: 8, 4>}]} {
    %c0 = arith.constant 0 : index
    %c0_0 = arith.constant 0 : index
    %0 = vector.load %arg1[%c0, %c0_0] : memref<8x16xf32, #tpu.memory_space<vmem>>, vector<8x16xf32>
    %c0_1 = arith.constant 0 : index
    %c0_2 = arith.constant 0 : index
    %1 = vector.load %arg2[%c0_1, %c0_2] : memref<16x128xf32, #tpu.memory_space<vmem>>, vector<16x128xf32>
    %cst = arith.constant dense<0.000000e+00> : vector<8x128xf32>
    %2 = tpu.matmul %0, %1, %cst {dimension_numbers = #tpu.dot_dimension_numbers<[1], [0], [0], [1], [0, 0, 1, 1], [], []>} : vector<8x16xf32>, vector<16x128xf32>, vector<8x128xf32> -> vector<8x128xf32>
    %c0_3 = arith.constant 0 : index
    %c0_4 = arith.constant 0 : index
    %3 = vector.load %arg3[%c0_3, %c0_4] : memref<1x128xf32, #tpu.memory_space<vmem>>, vector<1x128xf32>
    %4 = vector.broadcast %3 : vector<1x128xf32> to vector<8x128xf32>
    %5 = arith.addf %2, %4 : vector<8x128xf32>
    %cst_5 = arith.constant 0.000000e+00 : f32
    %6 = vector.broadcast %cst_5 : f32 to vector<8x128xf32>
    %7 = arith.cmpf oge, %5, %6 : vector<8x128xf32>
    %cst_6 = arith.constant 9.99999974E-6 : f32
    %8 = vector.broadcast %cst_6 : f32 to vector<8x128xf32>
    %9 = arith.mulf %8, %5 : vector<8x128xf32>
    %10 = arith.select %7, %5, %9 : vector<8x128xi1>, vector<8x128xf32>
    %c0_7 = arith.constant 0 : index
    %c0_8 = arith.constant 0 : index
    %11 = vector.load %arg4[%c0_7, %c0_8] : memref<128x4xf32, #tpu.memory_space<vmem>>, vector<128x4xf32>
    %cst_9 = arith.constant dense<0.000000e+00> : vector<8x4xf32>
    %12 = tpu.matmul %10, %11, %cst_9 {dimension_numbers = #tpu.dot_dimension_numbers<[1], [0], [0], [1], [0, 0, 1, 1], [], []>} : vector<8x128xf32>, vector<128x4xf32>, vector<8x4xf32> -> vector<8x4xf32>
    %c0_10 = arith.constant 0 : index
    %c0_11 = arith.constant 0 : index
    %13 = vector.load %arg5[%c0_10, %c0_11] : memref<1x4xf32, #tpu.memory_space<vmem>>, vector<1x4xf32>
    %14 = vector.broadcast %13 : vector<1x4xf32> to vector<8x4xf32>
    %15 = arith.addf %12, %14 : vector<8x4xf32>
    %c0_12 = arith.constant 0 : index
    %c0_13 = arith.constant 0 : index
    %16 = vector.load %arg6[%c0_12, %c0_13] : memref<8x4xf32, #tpu.memory_space<vmem>>, vector<8x4xf32>
    tpu.vector_store %arg6[%c0_12, %c0_13], %15 {strides = array<i32>} : memref<8x4xf32, #tpu.memory_space<vmem>>, vector<8x4xf32>,
    return
  }
  func.func @transform_0(%arg0: i32) -> (i32, i32) {
    %c0_i32 = arith.constant 0 : i32
    %c0_i32_0 = arith.constant 0 : i32
    return %arg0, %c0_i32 : i32, i32
  }
  func.func @transform_1(%arg0: i32) -> (i32, i32) {
    %c0_i32 = arith.constant 0 : i32
    %c0_i32_0 = arith.constant 0 : i32
    %c0_i32_1 = arith.constant 0 : i32
    return %c0_i32, %c0_i32_0 : i32, i32
  }
  func.func @transform_2(%arg0: i32) -> (i32, i32) {
    %c0_i32 = arith.constant 0 : i32
    %c0_i32_0 = arith.constant 0 : i32
    %c0_i32_1 = arith.constant 0 : i32
    return %c0_i32, %c0_i32_0 : i32, i32
  }
  func.func @transform_3(%arg0: i32) -> (i32, i32) {
    %c0_i32 = arith.constant 0 : i32
    %c0_i32_0 = arith.constant 0 : i32
    %c0_i32_1 = arith.constant 0 : i32
    return %c0_i32, %c0_i32_0 : i32, i32
  }
  func.func @transform_4(%arg0: i32) -> (i32, i32) {
    %c0_i32 = arith.constant 0 : i32
    %c0_i32_0 = arith.constant 0 : i32
    %c0_i32_1 = arith.constant 0 : i32
    return %c0_i32, %c0_i32_0 : i32, i32
  }
  func.func @transform_5(%arg0: i32) -> (i32, i32) {
    %c0_i32 = arith.constant 0 : i32
    %c0_i32_0 = arith.constant 0 : i32
    return %arg0, %c0_i32 : i32, i32
  }
}

</mosaic_0001>

<llo_original>
// kernel: tpu_custom_call.1
$region0: #{tpu_custom_call.1}
  #allocation0 [shape = 'u32[]', space=smem, size = 0x4, offset = 0x4, fixed_abs, tag = 'smem constant byte address 0x4 - core index']
  #allocation1 [shape = 'u32[72,128]{1,0:T(1,128)}', space=vmem, size = 0x9000, scoped, tag = 'internal scratch']
  %s0 = inlined_call_operand.vmem [shape: f32[8,16], index: 0, kind: input, shape index: {}]
  %s1 = inlined_call_operand.vmem [shape: f32[16,128], index: 1, kind: input, shape index: {}]
  %s2 = inlined_call_operand.vmem [shape: f32[1,128], index: 2, kind: input, shape index: {}]
  %s3 = inlined_call_operand.vmem [shape: f32[128,4], index: 3, kind: input, shape index: {}]
  %s4 = inlined_call_operand.vmem [shape: f32[1,4], index: 4, kind: input, shape index: {}]
  %s5 = inlined_call_operand.vmem [shape: f32[8,4], index: 5, kind: output, shape index: {}]
  %s6 = sld [smem:[#allocation0]]
  $region30: #{tpu_custom_call.1} parent=0
    _
  %s8 = ssub.s32 1, %s6
  %s9 = scalar_select 0, %s8, %s6
  // Predicated region
  $region2: #{tpu_custom_call.1} parent=0 // pred_check
    _
  $region3: #{tpu_custom_call.1} parent=0 // pred_check_branch
    %11 = sbr.rel (0) target = $region5
  $region4: #{tpu_custom_call.1} parent=0 // pred_region
    _
  $region5: #{tpu_custom_call.1} parent=0 // pred_fallthru
    _
  // Predicated region
  $region6: #{tpu_custom_call.1} parent=0 // pred_check
    _
  $region7: #{tpu_custom_call.1} parent=0 // pred_check_branch
    %13 = sbr.rel (0) target = $region9
  $region8: #{tpu_custom_call.1} parent=0 // pred_region
    _
  $region9: #{tpu_custom_call.1} parent=0 // pred_fallthru
    _
  // Predicated region
  $region10: #{tpu_custom_call.1} parent=0 // pred_check
    _
  $region11: #{tpu_custom_call.1} parent=0 // pred_check_branch
    %15 = sbr.rel (0) target = $region13
  $region12: #{tpu_custom_call.1} parent=0 // pred_region
    _
  $region13: #{tpu_custom_call.1} parent=0 // pred_fallthru
    _
  // Predicated region
  $region14: #{tpu_custom_call.1} parent=0 // pred_check
    _
  $region15: #{tpu_custom_call.1} parent=0 // pred_check_branch
    %17 = sbr.rel (0) target = $region17
  $region16: #{tpu_custom_call.1} parent=0 // pred_region
    _
  $region17: #{tpu_custom_call.1} parent=0 // pred_fallthru
    _
  // Predicated region
  $region18: #{tpu_custom_call.1} parent=0 // pred_check
    _
  $region19: #{tpu_custom_call.1} parent=0 // pred_check_branch
    %19 = sbr.rel (0) target = $region21
  $region20: #{tpu_custom_call.1} parent=0 // pred_region
    _
  $region21: #{tpu_custom_call.1} parent=0 // pred_fallthru
    _
  %v20 = vld [vmem:[%s0] sm:$0xff]
  %v21 = vld [vmem:[%s1] sm:$0xff]
  %v22 = vld [vmem:[%s1 + $0x8] sm:$0xff]
  %v23 = vld [vmem:[%s2] sm:$0x1]
  %v25 = vperm.slane %v23, 0
  %vm27 = vcmask 130048
  %v29 = vsel %vm27, %v20, 0
  %31 = vmatpush.msra.mxu0 0.0
  %32 = vmatpush.msra.mxu0 0.0
  %33 = vmatpush.msra.mxu0 0.0
  %34 = vmatpush.msra.mxu0 0.0
  %35 = vmatpush.msra.mxu0 0.0
  %36 = vmatpush.msra.mxu0 0.0
  %37 = vmatpush.msra.mxu0 0.0
  %38 = vmatpush.msra.mxu0 0.0
  %39 = vmatpush.msra.mxu0 0.0
  %40 = vmatpush.msra.mxu0 0.0
  %41 = vmatpush.msra.mxu0 0.0
  %42 = vmatpush.msra.mxu0 0.0
  %43 = vmatpush.msra.mxu0 0.0
  %44 = vmatpush.msra.mxu0 0.0
  %45 = vmatpush.msra.mxu0 %v22
  %46 = vmatpush.msra.mxu0 %v21
  %47 = vmatmul.f32.gmra.mxu0 %v29
  %v48 = vpop.f32.mrf.mxu0
  %v49 = vadd.f32 %v25, %v48
  %50 = vdwg.mxu0
  %vm51 = vcmp.ge.f32.partialorder %v49, 0.0
  %v52 = vmul.f32 %v49, 1e-05
  %v53 = vsel %vm51, %v49, %v52
  %v54 = vld [vmem:[%s3] sm:$0xff]
  %v55 = vld [vmem:[%s3 + $0x8] sm:$0xff]
  %v56 = vld [vmem:[%s3 + $0x10] sm:$0xff]
  %v57 = vld [vmem:[%s3 + $0x18] sm:$0xff]
  %v58 = vld [vmem:[%s3 + $0x20] sm:$0xff]
  %v59 = vld [vmem:[%s3 + $0x28] sm:$0xff]
  %v60 = vld [vmem:[%s3 + $0x30] sm:$0xff]
  %v61 = vld [vmem:[%s3 + $0x38] sm:$0xff]
  %v62 = vld [vmem:[%s3 + $0x40] sm:$0xff]
  %v63 = vld [vmem:[%s3 + $0x48] sm:$0xff]
  %v64 = vld [vmem:[%s3 + $0x50] sm:$0xff]
  %v65 = vld [vmem:[%s3 + $0x58] sm:$0xff]
  %v66 = vld [vmem:[%s3 + $0x60] sm:$0xff]
  %v67 = vld [vmem:[%s3 + $0x68] sm:$0xff]
  %v68 = vld [vmem:[%s3 + $0x70] sm:$0xff]
  %v69 = vld [vmem:[%s3 + $0x78] sm:$0xff]
  %v70 = vld [vmem:[%s4] sm:$0x1]
  %v72 = vperm.slane %v70, 0
  %74 = vmatpush.msra.mxu0 %v69
  %75 = vmatpush.msra.mxu0 %v68
  %76 = vmatpush.msra.mxu0 %v67
  %77 = vmatpush.msra.mxu0 %v66
  %78 = vmatpush.msra.mxu0 %v65
  %79 = vmatpush.msra.mxu0 %v64
  %80 = vmatpush.msra.mxu0 %v63
  %81 = vmatpush.msra.mxu0 %v62
  %82 = vmatpush.msra.mxu0 %v61
  %83 = vmatpush.msra.mxu0 %v60
  %84 = vmatpush.msra.mxu0 %v59
  %85 = vmatpush.msra.mxu0 %v58
  %86 = vmatpush.msra.mxu0 %v57
  %87 = vmatpush.msra.mxu0 %v56
  %88 = vmatpush.msra.mxu0 %v55
  %89 = vmatpush.msra.mxu0 %v54
  %90 = vmatmul.f32.gmra.mxu0 %v53
  %v91 = vpop.f32.mrf.mxu0
  %v92 = vadd.f32 %v72, %v91
  %93 = vdwg.mxu0
  %vm94 = vcmask 31744
  %95 = vst.msk [vmem:[%s5] sm:$0xff] %vm94, %v92
  // Predicated region
  $region22: #{tpu_custom_call.1} parent=0 // pred_check
    _
  $region23: #{tpu_custom_call.1} parent=0 // pred_check_branch
    %97 = sbr.rel (0) target = $region25
  $region24: #{tpu_custom_call.1} parent=0 // pred_region
    _
  $region25: #{tpu_custom_call.1} parent=0 // pred_fallthru
    _
  // Predicated region
  $region26: #{tpu_custom_call.1} parent=0 // pred_check
    _
  $region27: #{tpu_custom_call.1} parent=0 // pred_check_branch
    %99 = sbr.rel (0) target = $region29
  $region28: #{tpu_custom_call.1} parent=0 // pred_region
    _
  $region29: #{tpu_custom_call.1} parent=0 // pred_fallthru
    _

// kernel: tpu_custom_call.1
$region0: #{tpu_custom_call.1}
  #allocation0 [shape = 'u32[]', space=smem, size = 0x4, offset = 0x4, fixed_abs, tag = 'smem constant byte address 0x4 - core index']
  #allocation1 [shape = 'u32[72,128]{1,0:T(1,128)}', space=vmem, size = 0x9000, scoped, tag = 'internal scratch']
  %s0 = inlined_call_operand.vmem [shape: f32[8,16], index: 0, kind: input, shape index: {}]
  %s1 = inlined_call_operand.vmem [shape: f32[16,128], index: 1, kind: input, shape index: {}]
  %s2 = inlined_call_operand.vmem [shape: f32[1,128], index: 2, kind: input, shape index: {}]
  %s3 = inlined_call_operand.vmem [shape: f32[128,4], index: 3, kind: input, shape index: {}]
  %s4 = inlined_call_operand.vmem [shape: f32[1,4], index: 4, kind: input, shape index: {}]
  %s5 = inlined_call_operand.vmem [shape: f32[8,4], index: 5, kind: output, shape index: {}]
  %s6 = sld [smem:[#allocation0]]
  $region30: #{tpu_custom_call.1} parent=0
    _
  %s8 = ssub.s32 1, %s6
  %s9 = scalar_select 0, %s8, %s6
  // Predicated region
  $region2: #{tpu_custom_call.1} parent=0 // pred_check
    _
  $region3: #{tpu_custom_call.1} parent=0 // pred_check_branch
    %11 = sbr.rel (0) target = $region5
  $region4: #{tpu_custom_call.1} parent=0 // pred_region
    _
  $region5: #{tpu_custom_call.1} parent=0 // pred_fallthru
    _
  // Predicated region
  $region6: #{tpu_custom_call.1} parent=0 // pred_check
    _
  $region7: #{tpu_custom_call.1} parent=0 // pred_check_branch
    %13 = sbr.rel (0) target = $region9
  $region8: #{tpu_custom_call.1} parent=0 // pred_region
    _
  $region9: #{tpu_custom_call.1} parent=0 // pred_fallthru
    _
  // Predicated region
  $region10: #{tpu_custom_call.1} parent=0 // pred_check
    _
  $region11: #{tpu_custom_call.1} parent=0 // pred_check_branch
    %15 = sbr.rel (0) target = $region13
  $region12: #{tpu_custom_call.1} parent=0 // pred_region
    _
  $region13: #{tpu_custom_call.1} parent=0 // pred_fallthru
    _
  // Predicated region
  $region14: #{tpu_custom_call.1} parent=0 // pred_check
    _
  $region15: #{tpu_custom_call.1} parent=0 // pred_check_branch
    %17 = sbr.rel (0) target = $region17
  $region16: #{tpu_custom_call.1} parent=0 // pred_region
    _
  $region17: #{tpu_custom_call.1} parent=0 // pred_fallthru
    _
  // Predicated region
  $region18: #{tpu_custom_call.1} parent=0 // pred_check
    _
  $region19: #{tpu_custom_call.1} parent=0 // pred_check_branch
    %19 = sbr.rel (0) target = $region21
  $region20: #{tpu_custom_call.1} parent=0 // pred_region
    _
  $region21: #{tpu_custom_call.1} parent=0 // pred_fallthru
    _
  %v20 = vld [vmem:[%s0] sm:$0xff]
  %v21 = vld [vmem:[%s1] sm:$0xff]
  %v22 = vld [vmem:[%s1 + $0x8] sm:$0xff]
  %v23 = vld [vmem:[%s2] sm:$0x1]
  %v25 = vperm.slane %v23, 0
  %vm27 = vcmask 130048
  %v29 = vsel %vm27, %v20, 0
  %31 = vmatpush.msra.mxu0 0.0
  %32 = vmatpush.msra.mxu0 0.0
  %33 = vmatpush.msra.mxu0 0.0
  %34 = vmatpush.msra.mxu0 0.0
  %35 = vmatpush.msra.mxu0 0.0
  %36 = vmatpush.msra.mxu0 0.0
  %37 = vmatpush.msra.mxu0 0.0
  %38 = vmatpush.msra.mxu0 0.0
  %39 = vmatpush.msra.mxu0 0.0
  %40 = vmatpush.msra.mxu0 0.0
  %41 = vmatpush.msra.mxu0 0.0
  %42 = vmatpush.msra.mxu0 0.0
  %43 = vmatpush.msra.mxu0 0.0
  %44 = vmatpush.msra.mxu0 0.0
  %45 = vmatpush.msra.mxu0 %v22
  %46 = vmatpush.msra.mxu0 %v21
  %47 = vmatmul.f32.gmra.mxu0 %v29
  %v48 = vpop.f32.mrf.mxu0
  %v49 = vadd.f32 %v25, %v48
  %50 = vdwg.mxu0
  %vm51 = vcmp.ge.f32.partialorder %v49, 0.0
  %v52 = vmul.f32 %v49, 1e-05
  %v53 = vsel %vm51, %v49, %v52
  %v54 = vld [vmem:[%s3] sm:$0xff]
  %v55 = vld [vmem:[%s3 + $0x8] sm:$0xff]
  %v56 = vld [vmem:[%s3 + $0x10] sm:$0xff]
  %v57 = vld [vmem:[%s3 + $0x18] sm:$0xff]
  %v58 = vld [vmem:[%s3 + $0x20] sm:$0xff]
  %v59 = vld [vmem:[%s3 + $0x28] sm:$0xff]
  %v60 = vld [vmem:[%s3 + $0x30] sm:$0xff]
  %v61 = vld [vmem:[%s3 + $0x38] sm:$0xff]
  %v62 = vld [vmem:[%s3 + $0x40] sm:$0xff]
  %v63 = vld [vmem:[%s3 + $0x48] sm:$0xff]
  %v64 = vld [vmem:[%s3 + $0x50] sm:$0xff]
  %v65 = vld [vmem:[%s3 + $0x58] sm:$0xff]
  %v66 = vld [vmem:[%s3 + $0x60] sm:$0xff]
  %v67 = vld [vmem:[%s3 + $0x68] sm:$0xff]
  %v68 = vld [vmem:[%s3 + $0x70] sm:$0xff]
  %v69 = vld [vmem:[%s3 + $0x78] sm:$0xff]
  %v70 = vld [vmem:[%s4] sm:$0x1]
  %v72 = vperm.slane %v70, 0
  %74 = vmatpush.msra.mxu0 %v69
  %75 = vmatpush.msra.mxu0 %v68
  %76 = vmatpush.msra.mxu0 %v67
  %77 = vmatpush.msra.mxu0 %v66
  %78 = vmatpush.msra.mxu0 %v65
  %79 = vmatpush.msra.mxu0 %v64
  %80 = vmatpush.msra.mxu0 %v63
  %81 = vmatpush.msra.mxu0 %v62
  %82 = vmatpush.msra.mxu0 %v61
  %83 = vmatpush.msra.mxu0 %v60
  %84 = vmatpush.msra.mxu0 %v59
  %85 = vmatpush.msra.mxu0 %v58
  %86 = vmatpush.msra.mxu0 %v57
  %87 = vmatpush.msra.mxu0 %v56
  %88 = vmatpush.msra.mxu0 %v55
  %89 = vmatpush.msra.mxu0 %v54
  %90 = vmatmul.f32.gmra.mxu0 %v53
  %v91 = vpop.f32.mrf.mxu0
  %v92 = vadd.f32 %v72, %v91
  %93 = vdwg.mxu0
  %vm94 = vcmask 31744
  %95 = vst.msk [vmem:[%s5] sm:$0xff] %vm94, %v92
  // Predicated region
  $region22: #{tpu_custom_call.1} parent=0 // pred_check
    _
  $region23: #{tpu_custom_call.1} parent=0 // pred_check_branch
    %97 = sbr.rel (0) target = $region25
  $region24: #{tpu_custom_call.1} parent=0 // pred_region
    _
  $region25: #{tpu_custom_call.1} parent=0 // pred_fallthru
    _
  // Predicated region
  $region26: #{tpu_custom_call.1} parent=0 // pred_check
    _
  $region27: #{tpu_custom_call.1} parent=0 // pred_check_branch
    %99 = sbr.rel (0) target = $region29
  $region28: #{tpu_custom_call.1} parent=0 // pred_region
    _
  $region29: #{tpu_custom_call.1} parent=0 // pred_fallthru
    _

</llo_original>
